<compile_context>
chip_gen: v7x
topology: tpu7x:2x2x1
jax: 0.10.0
libtpu: 0.0.40
codegen_flags: <defaults>
</compile_context>

<pallas_src>
import jax
import jax.numpy as jnp
from jax.experimental import pallas as pl
from jax.experimental.pallas import tpu as pltpu

# Torch hidden sizes and their hardware-padded counterparts.
_H0, _H1 = 200, 50
_H0P, _H1P = 256, 128


def _round_up(x, m):
    return (x + m - 1) // m * m


def _prompt_gen_kernel(z_ref, w0_ref, w1_ref, w2mu_ref, w2lv_ref,
                       mu_ref, logvar_ref, kl_ref):
    # z: (1, KP) row vector = [latent, 1, 0, ...]; the trailing 1 activates the
    # bias rows folded into w0/w1, so each layer is a single MXU dot.
    z = z_ref[...]

    h0 = jnp.dot(z, w0_ref[...], preferred_element_type=jnp.float32)
    h0 = jnp.where(h0 > 0, h0, 0.01 * h0)   # LeakyReLU(0.01); pad lanes stay 0 / 1

    h1 = jnp.dot(h0, w1_ref[...], preferred_element_type=jnp.float32)
    h1 = jnp.where(h1 > 0, h1, 0.01 * h1)

    # Split output projection: each half written directly to its own output
    # ref (no lane-axis slicing of a (1, 2M) intermediate).
    mu = jnp.dot(h1, w2mu_ref[...], preferred_element_type=jnp.float32)
    log_var = jnp.dot(h1, w2lv_ref[...], preferred_element_type=jnp.float32)
    mu_ref[...] = mu
    logvar_ref[...] = log_var

    # kl = 0.5 * sum(mu^2 + var - log(1e-8 + var) - 1) / M,  var = exp(log_var)
    var = jnp.exp(log_var)
    term = mu * mu + var - jnp.log(1e-8 + var) - 1.0
    M = mu_ref.shape[1]
    kl_ref[0] = (0.5 / M) * jnp.sum(term)    # scalar result straight to SMEM


def pack_params(w0, b0, w1, b1, w2, n_ctx, ctx_dim):
    """One-time parameter prep: pad hidden dims to 128-multiples, fold biases
    into the weight matrices (activated by a constant-1 input lane), and split
    the final projection into mu / log_var halves.  Exact in the valid region:
    all padded rows/columns are zero and LeakyReLU(0) = 0."""
    L = w0.shape[0]
    M = n_ctx * ctx_dim
    KP = _round_up(L + 1, 128)

    w0_ext = jnp.zeros((KP, _H0P), jnp.float32)
    w0_ext = w0_ext.at[:L, :_H0].set(w0.astype(jnp.float32))
    w0_ext = w0_ext.at[L, :_H0].set(b0.astype(jnp.float32))   # layer0 bias row
    w0_ext = w0_ext.at[L, _H0].set(1.0)                       # constant-1 lane -> carries b1

    w1_ext = jnp.zeros((_H0P, _H1P), jnp.float32)
    w1_ext = w1_ext.at[:_H0, :_H1].set(w1.astype(jnp.float32))
    w1_ext = w1_ext.at[_H0, :_H1].set(b1.astype(jnp.float32)) # layer1 bias row

    w2_mu = jnp.zeros((_H1P, M), jnp.float32).at[:_H1, :].set(w2[:, :M].astype(jnp.float32))
    w2_lv = jnp.zeros((_H1P, M), jnp.float32).at[:_H1, :].set(w2[:, M:].astype(jnp.float32))
    return w0_ext, w1_ext, w2_mu, w2_lv


def prompt_generator_forward(latent, packed_params, n_ctx, ctx_dim):
    """Returns (ctx_matrix, log_var_matrix, kl_loss) matching the torch module."""
    w0_ext, w1_ext, w2_mu, w2_lv = packed_params
    M = n_ctx * ctx_dim
    L = latent.shape[0]
    KP = w0_ext.shape[0]

    # Augmented latent row vector: [latent, 1, 0...] (lane-padded to KP).
    z = jnp.zeros((1, KP), jnp.float32)
    z = z.at[0, :L].set(latent.astype(jnp.float32))
    z = z.at[0, L].set(1.0)

    vmem = pl.BlockSpec(memory_space=pltpu.MemorySpace.VMEM)
    smem = pl.BlockSpec(memory_space=pltpu.MemorySpace.SMEM)

    mu, log_var, kl = pl.pallas_call(
        _prompt_gen_kernel,
        out_shape=(
            jax.ShapeDtypeStruct((1, M), jnp.float32),
            jax.ShapeDtypeStruct((1, M), jnp.float32),
            jax.ShapeDtypeStruct((1,), jnp.float32),
        ),
        in_specs=[vmem] * 5,
        out_specs=(vmem, vmem, smem),
    )(z, w0_ext, w1_ext, w2_mu, w2_lv)

    ctx_matrix = mu.reshape(n_ctx, ctx_dim)
    log_var_matrix = log_var.reshape(n_ctx, ctx_dim)
    return ctx_matrix, log_var_matrix, kl[0]


def _torch_linear_init(key, fan_in, fan_out, with_bias=True):
    """Deterministic init mimicking torch.nn.Linear default (+/- 1/sqrt(fan_in))."""
    bound = 1.0 / jnp.sqrt(jnp.float32(fan_in))
    kw, kb = jax.random.split(key)
    w = jax.random.uniform(kw, (fan_in, fan_out), jnp.float32, -bound, bound)
    if with_bias:
        b = jax.random.uniform(kb, (fan_out,), jnp.float32, -bound, bound)
        return w, b
    return w, None


def _reference(latent, w0, b0, w1, b1, w2, n_ctx, ctx_dim):
    hp = jax.lax.Precision.HIGHEST

    def lrelu(x):
        return jnp.where(x > 0, x, 0.01 * x)

    h = lrelu(jnp.dot(latent, w0, precision=hp) + b0)
    h = lrelu(jnp.dot(h, w1, precision=hp) + b1)
    h = jnp.dot(h, w2, precision=hp)
    M = n_ctx * ctx_dim
    mu, log_var = h[:M], h[M:]
    std = jnp.exp(0.5 * log_var)
    kl = 0.5 * jnp.sum(mu ** 2 + std ** 2 - jnp.log(1e-8 + std ** 2) - 1.0) / M
    return mu.reshape(n_ctx, ctx_dim), log_var.reshape(n_ctx, ctx_dim), kl


if __name__ == "__main__":
    # Small, module-consistent shapes.
    latent_code_dim = 32
    n_ctx = 8          # cfg.PROMP_LEARNER.N_CTX
    ctx_dim = 32       # clip_model.ln_final.weight.shape[0]
    out_dim = 2 * n_ctx * ctx_dim

    key = jax.random.PRNGKey(0)
    k_lat, k0, k1, k2 = jax.random.split(key, 4)

    # nn.init.normal_(latent_code, std=0.02)
    latent = 0.02 * jax.random.normal(k_lat, (latent_code_dim,), jnp.float32)
    w0, b0 = _torch_linear_init(k0, latent_code_dim, _H0)
    w1, b1 = _torch_linear_init(k1, _H0, _H1)
    w2, _ = _torch_linear_init(k2, _H1, out_dim, with_bias=False)

    packed = pack_params(w0, b0, w1, b1, w2, n_ctx, ctx_dim)
    packed = jax.tree_util.tree_map(jax.block_until_ready, packed)

    ctx_matrix, log_var_matrix, kl_loss = prompt_generator_forward(
        latent, packed, n_ctx, ctx_dim)
    jax.block_until_ready((ctx_matrix, log_var_matrix, kl_loss))

    # Correctness check against a pure-JAX reference on the unpadded params.
    ref_ctx, ref_logvar, ref_kl = _reference(latent, w0, b0, w1, b1, w2,
                                             n_ctx, ctx_dim)
    assert jnp.allclose(ctx_matrix, ref_ctx, atol=1e-5, rtol=1e-4)
    assert jnp.allclose(log_var_matrix, ref_logvar, atol=1e-5, rtol=1e-4)
    assert jnp.allclose(kl_loss, ref_kl, atol=1e-5, rtol=1e-4)

    # TODO(synk): build_txt_enc_input (tokenizer / CLIP token_embedding concat)
    # is host-side data prep, not part of forward(); omitted from the kernel.
    print("KERNEL_OK")
</pallas_src>

<mosaic_0001>
module attributes {stable_mosaic.version = 11 : i64} {
  func.func @_prompt_gen_kernel(%arg0: memref<1x128xf32, #tpu.memory_space<vmem>>, %arg1: memref<128x256xf32, #tpu.memory_space<vmem>>, %arg2: memref<256x128xf32, #tpu.memory_space<vmem>>, %arg3: memref<128x256xf32, #tpu.memory_space<vmem>>, %arg4: memref<128x256xf32, #tpu.memory_space<vmem>>, %arg5: memref<1x256xf32, #tpu.memory_space<vmem>>, %arg6: memref<1x256xf32, #tpu.memory_space<vmem>>, %arg7: memref<1xf32, #tpu.memory_space<smem>>) attributes {dimension_semantics = [], scalar_prefetch = 0 : i64, scratch_operands = 0 : i64, tpu.core_type = #tpu.core_type<tc>} {
    %c0 = arith.constant 0 : index
    %c0_0 = arith.constant 0 : index
    %0 = vector.load %arg0[%c0, %c0_0] : memref<1x128xf32, #tpu.memory_space<vmem>>, vector<1x128xf32>
    %c0_1 = arith.constant 0 : index
    %c0_2 = arith.constant 0 : index
    %1 = vector.load %arg1[%c0_1, %c0_2] : memref<128x256xf32, #tpu.memory_space<vmem>>, vector<128x256xf32>
    %cst = arith.constant dense<0.000000e+00> : vector<1x256xf32>
    %2 = tpu.matmul %0, %1, %cst {dimension_numbers = #tpu.dot_dimension_numbers<[1], [0], [0], [1], [0, 0, 1, 1], [], []>} : vector<1x128xf32>, vector<128x256xf32>, vector<1x256xf32> -> vector<1x256xf32>
    %cst_3 = arith.constant 0.000000e+00 : f32
    %3 = vector.broadcast %cst_3 : f32 to vector<1x256xf32>
    %4 = arith.cmpf ogt, %2, %3 : vector<1x256xf32>
    %cst_4 = arith.constant 0.00999999977 : f32
    %5 = vector.broadcast %cst_4 : f32 to vector<1x256xf32>
    %6 = arith.mulf %5, %2 : vector<1x256xf32>
    %7 = arith.select %4, %2, %6 : vector<1x256xi1>, vector<1x256xf32>
    %c0_5 = arith.constant 0 : index
    %c0_6 = arith.constant 0 : index
    %8 = vector.load %arg2[%c0_5, %c0_6] : memref<256x128xf32, #tpu.memory_space<vmem>>, vector<256x128xf32>
    %cst_7 = arith.constant dense<0.000000e+00> : vector<1x128xf32>
    %9 = tpu.matmul %7, %8, %cst_7 {dimension_numbers = #tpu.dot_dimension_numbers<[1], [0], [0], [1], [0, 0, 1, 1], [], []>} : vector<1x256xf32>, vector<256x128xf32>, vector<1x128xf32> -> vector<1x128xf32>
    %cst_8 = arith.constant 0.000000e+00 : f32
    %10 = vector.broadcast %cst_8 : f32 to vector<1x128xf32>
    %11 = arith.cmpf ogt, %9, %10 : vector<1x128xf32>
    %cst_9 = arith.constant 0.00999999977 : f32
    %12 = vector.broadcast %cst_9 : f32 to vector<1x128xf32>
    %13 = arith.mulf %12, %9 : vector<1x128xf32>
    %14 = arith.select %11, %9, %13 : vector<1x128xi1>, vector<1x128xf32>
    %c0_10 = arith.constant 0 : index
    %c0_11 = arith.constant 0 : index
    %15 = vector.load %arg3[%c0_10, %c0_11] : memref<128x256xf32, #tpu.memory_space<vmem>>, vector<128x256xf32>
    %cst_12 = arith.constant dense<0.000000e+00> : vector<1x256xf32>
    %16 = tpu.matmul %14, %15, %cst_12 {dimension_numbers = #tpu.dot_dimension_numbers<[1], [0], [0], [1], [0, 0, 1, 1], [], []>} : vector<1x128xf32>, vector<128x256xf32>, vector<1x256xf32> -> vector<1x256xf32>
    %c0_13 = arith.constant 0 : index
    %c0_14 = arith.constant 0 : index
    %17 = vector.load %arg4[%c0_13, %c0_14] : memref<128x256xf32, #tpu.memory_space<vmem>>, vector<128x256xf32>
    %cst_15 = arith.constant dense<0.000000e+00> : vector<1x256xf32>
    %18 = tpu.matmul %14, %17, %cst_15 {dimension_numbers = #tpu.dot_dimension_numbers<[1], [0], [0], [1], [0, 0, 1, 1], [], []>} : vector<1x128xf32>, vector<128x256xf32>, vector<1x256xf32> -> vector<1x256xf32>
    %c0_16 = arith.constant 0 : index
    %c0_17 = arith.constant 0 : index
    %19 = vector.load %arg5[%c0_16, %c0_17] : memref<1x256xf32, #tpu.memory_space<vmem>>, vector<1x256xf32>
    tpu.vector_store %arg5[%c0_16, %c0_17], %16 {strides = array<i32>} : memref<1x256xf32, #tpu.memory_space<vmem>>, vector<1x256xf32>,
    %c0_18 = arith.constant 0 : index
    %c0_19 = arith.constant 0 : index
    %20 = vector.load %arg6[%c0_18, %c0_19] : memref<1x256xf32, #tpu.memory_space<vmem>>, vector<1x256xf32>
    tpu.vector_store %arg6[%c0_18, %c0_19], %18 {strides = array<i32>} : memref<1x256xf32, #tpu.memory_space<vmem>>, vector<1x256xf32>,
    %21 = math.exp %18 : vector<1x256xf32>
    %22 = arith.mulf %16, %16 : vector<1x256xf32>
    %23 = arith.addf %22, %21 : vector<1x256xf32>
    %cst_20 = arith.constant 9.99999993E-9 : f32
    %24 = vector.broadcast %cst_20 : f32 to vector<1x256xf32>
    %25 = arith.addf %24, %21 : vector<1x256xf32>
    %26 = math.log %25 : vector<1x256xf32>
    %27 = arith.subf %23, %26 : vector<1x256xf32>
    %cst_21 = arith.constant 1.000000e+00 : f32
    %28 = vector.broadcast %cst_21 : f32 to vector<1x256xf32>
    %29 = arith.subf %27, %28 : vector<1x256xf32>
    %30 = vector.shape_cast %29 : vector<1x256xf32> to vector<1x1x256xf32>
    %cst_22 = arith.constant dense<0.000000e+00> : vector<1xf32>
    %31 = vector.multi_reduction <add>, %30, %cst_22 [1, 2] : vector<1x1x256xf32> to vector<1xf32>
    %32 = vector.shape_cast %31 : vector<1xf32> to vector<1x1x1xf32>
    %33 = vector.extract %32[0, 0, 0] : f32 from vector<1x1x1xf32>
    %cst_23 = arith.constant 0.001953125 : f32
    %34 = arith.mulf %cst_23, %33 : f32
    %c0_24 = arith.constant 0 : index
    %35 = memref.load %arg7[%c0_24] : memref<1xf32, #tpu.memory_space<smem>>
    memref.store %34, %arg7[%c0_24] : memref<1xf32, #tpu.memory_space<smem>>
    return
  }
}

</mosaic_0001>

<llo_original>
// kernel: tpu_custom_call.1
$region0: #{tpu_custom_call.1}
  #allocation0 [shape = 'u32[]', space=smem, size = 0x4, offset = 0x4, fixed_abs, tag = 'smem constant byte address 0x4 - core index']
  #allocation1 [shape = 'u32[144,128]{1,0:T(1,128)}', space=vmem, size = 0x12000, scoped, tag = 'internal scratch']
  %s0 = inlined_call_operand.hbm [shape: f32[1,128], index: 0, kind: input, shape index: {}]
  %s1 = inlined_call_operand.hbm [shape: f32[128,256], index: 1, kind: input, shape index: {}]
  %s2 = inlined_call_operand.hbm [shape: f32[256,128], index: 2, kind: input, shape index: {}]
  %s3 = inlined_call_operand.hbm [shape: f32[128,256], index: 3, kind: input, shape index: {}]
  %s4 = inlined_call_operand.hbm [shape: f32[128,256], index: 4, kind: input, shape index: {}]
  %s5 = inlined_call_operand.hbm [shape: f32[1,256], index: 5, kind: output, shape index: {0}]
  %s6 = inlined_call_operand.hbm [shape: f32[1,256], index: 6, kind: output, shape index: {1}]
  %s7 = inlined_call_operand.hbm [shape: f32[1], index: 7, kind: output, shape index: {2}]
  %8 = xla_tuple %s5, %s6, %s7
  %s9 = sld [smem:[#allocation0]]
  $region66: #{tpu_custom_call.1} parent=0
    _
  %s11 = ssub.s32 1, %s9
  %s12 = scalar_select 0, %s11, %s9
  $region1: #{tpu_custom_call.1} parent=0
    #allocation2 [shape = 'u8[512]{0}', space=vmem, size = 0x400, scoped, tag = 'input window, operand 0, single buffered']
    #allocation3 [shape = 's32[1]{0}', space=sflag, size = 0x4, scoped, tag = 'scoped memory for tpu_custom_call.1']
    #allocation4 [shape = 's32[1]{0}', space=sflag, size = 0x4, scoped, tag = 'scoped memory for tpu_custom_call.1']
    #allocation5 [shape = 's32[1]{0}', space=sflag, size = 0x4, scoped, tag = 'scoped memory for tpu_custom_call.1']
    #allocation6 [shape = 'u8[131072]{0}', space=vmem, size = 0x20000, scoped, tag = 'input window, operand 1, single buffered']
    #allocation7 [shape = 's32[1]{0}', space=sflag, size = 0x4, scoped, tag = 'scoped memory for tpu_custom_call.1']
    #allocation8 [shape = 'u8[131072]{0}', space=vmem, size = 0x20000, scoped, tag = 'input window, operand 2, single buffered']
    #allocation9 [shape = 'u8[131072]{0}', space=vmem, size = 0x20000, scoped, tag = 'input window, operand 3, single buffered']
    #allocation10 [shape = 's32[1]{0}', space=sflag, size = 0x4, scoped, tag = 'scoped memory for tpu_custom_call.1']
    #allocation11 [shape = 'u8[131072]{0}', space=vmem, size = 0x20000, scoped, tag = 'input window, operand 4, single buffered']
    #allocation12 [shape = 'u8[1024]{0}', space=vmem, size = 0x400, scoped, tag = 'output window, operand 0, single buffered']
    #allocation13 [shape = 'u8[1024]{0}', space=vmem, size = 0x400, scoped, tag = 'output window, operand 1, single buffered']
    #allocation14 [shape = 's32[1]{0}', space=sflag, size = 0x4, scoped, tag = 'scoped memory for tpu_custom_call.1']
    #allocation15 [shape = 'u8[512]{0}', space=smem, size = 0x200, scoped, tag = 'output window, operand 2, single buffered']
    %13 = vsyncpa [#allocation3], 0
    %14 = vsyncpa [#allocation7], 0
    %15 = vsyncpa [#allocation10], 0
    %16 = vsyncpa [#allocation4], 0
    %17 = vsyncpa [#allocation14], 0
    %18 = vsyncpa [#allocation5], 0
    // Predicated region
    $region2: #{tpu_custom_call.1} parent=1 // pred_check
      _
    $region3: #{tpu_custom_call.1} parent=1 // pred_check_branch
      %20 = sbr.rel (0) target = $region5
    $region4: #{tpu_custom_call.1} parent=1 // pred_region
      %s22 = ssub.s32 16, 16
      %23 = vsyncadd [#allocation3], %s22
      %s25 = sshll.u32 [#allocation2], 4
      %s26 = int_to_ptr.vmem [resolvable:$true] %s25
      %28 = dma.hbm_to_vmem [thread:$0]  %s0, 16, %s26, [#allocation3]
    $region5: #{tpu_custom_call.1} parent=1 // pred_fallthru
      _
    // Predicated region
    $region6: #{tpu_custom_call.1} parent=1 // pred_check
      _
    $region7: #{tpu_custom_call.1} parent=1 // pred_check_branch
      %30 = sbr.rel (0) target = $region9
    $region8: #{tpu_custom_call.1} parent=1 // pred_region
      %s32 = ssub.s32 4096, 4096
      %33 = vsyncadd [#allocation7], %s32
      %s34 = sshll.u32 [#allocation6], 4
      %s35 = int_to_ptr.vmem [resolvable:$true] %s34
      %40 = dma.hbm_to_vmem [thread:$0]  %s1, 4096, %s35, [#allocation7], 256, 256, 16
    $region9: #{tpu_custom_call.1} parent=1 // pred_fallthru
      _
    // Predicated region
    $region10: #{tpu_custom_call.1} parent=1 // pred_check
      _
    $region11: #{tpu_custom_call.1} parent=1 // pred_check_branch
      %42 = sbr.rel (0) target = $region13
    $region12: #{tpu_custom_call.1} parent=1 // pred_region
      %s44 = ssub.s32 4096, 4096
      %45 = vsyncadd [#allocation7], %s44
      %s46 = sshll.u32 [#allocation8], 4
      %s47 = int_to_ptr.vmem [resolvable:$true] %s46
      %52 = dma.hbm_to_vmem [thread:$0]  %s2, 4096, %s47, [#allocation7], 128, 128, 8
    $region13: #{tpu_custom_call.1} parent=1 // pred_fallthru
      _
    // Predicated region
    $region14: #{tpu_custom_call.1} parent=1 // pred_check
      _
    $region15: #{tpu_custom_call.1} parent=1 // pred_check_branch
      %54 = sbr.rel (0) target = $region17
    $region16: #{tpu_custom_call.1} parent=1 // pred_region
      %s56 = ssub.s32 4096, 4096
      %57 = vsyncadd [#allocation10], %s56
      %s58 = sshll.u32 [#allocation9], 4
      %s59 = int_to_ptr.vmem [resolvable:$true] %s58
      %64 = dma.hbm_to_vmem [thread:$0]  %s3, 4096, %s59, [#allocation10], 256, 256, 16
    $region17: #{tpu_custom_call.1} parent=1 // pred_fallthru
      _
    // Predicated region
    $region18: #{tpu_custom_call.1} parent=1 // pred_check
      _
    $region19: #{tpu_custom_call.1} parent=1 // pred_check_branch
      %66 = sbr.rel (0) target = $region21
    $region20: #{tpu_custom_call.1} parent=1 // pred_region
      %s68 = ssub.s32 4096, 4096
      %69 = vsyncadd [#allocation10], %s68
      %s70 = sshll.u32 [#allocation11], 4
      %s71 = int_to_ptr.vmem [resolvable:$true] %s70
      %76 = dma.hbm_to_vmem [thread:$0]  %s4, 4096, %s71, [#allocation10], 256, 256, 16
    $region21: #{tpu_custom_call.1} parent=1 // pred_fallthru
      _
    // Predicated region
    $region22: #{tpu_custom_call.1} parent=1 // pred_check
      _
    $region23: #{tpu_custom_call.1} parent=1 // pred_check_branch
      %78 = sbr.rel (0) target = $region25
    $region24: #{tpu_custom_call.1} parent=1 // pred_region
      %79 = dma.done [#allocation3], 16
    $region25: #{tpu_custom_call.1} parent=1 // pred_fallthru
      _
    // Predicated region
    $region26: #{tpu_custom_call.1} parent=1 // pred_check
      _
    $region27: #{tpu_custom_call.1} parent=1 // pred_check_branch
      %81 = sbr.rel (0) target = $region29
    $region28: #{tpu_custom_call.1} parent=1 // pred_region
      %82 = dma.done [#allocation7], 4096
    $region29: #{tpu_custom_call.1} parent=1 // pred_fallthru
      _
    // Predicated region
    $region30: #{tpu_custom_call.1} parent=1 // pred_check
      _
    $region31: #{tpu_custom_call.1} parent=1 // pred_check_branch
      %84 = sbr.rel (0) target = $region33
    $region32: #{tpu_custom_call.1} parent=1 // pred_region
      %85 = dma.done [#allocation7], 4096
    $region33: #{tpu_custom_call.1} parent=1 // pred_fallthru
      _
    // Predicated region
    $region34: #{tpu_custom_call.1} parent=1 // pred_check
      _
    $region35: #{tpu_custom_call.1} parent=1 // pred_check_branch
      %87 = sbr.rel (0) target = $region37
    $region36: #{tpu_custom_call.1} parent=1 // pred_region
      %88 = dma.done [#allocation10], 4096
    $region37: #{tpu_custom_call.1} parent=1 // pred_fallthru
      _
    // Predicated region
    $region38: #{tpu_custom_call.1} parent=1 // pred_check
      _
    $region39: #{tpu_custom_call.1} parent=1 // pred_check_branch
      %90 = sbr.rel (0) target = $region41
    $region40: #{tpu_custom_call.1} parent=1 // pred_region
      %91 = dma.done [#allocation10], 4096
    $region41: #{tpu_custom_call.1} parent=1 // pred_fallthru
      _
    %v92 = vld [vmem:[#allocation2] sm:$0x1]
    %v93 = vld [vmem:[#allocation6] sm:$0xff]
    %v94 = vld [vmem:[#allocation6 + $0x8] sm:$0xff]
    %v95 = vld [vmem:[#allocation6 + $0x10] sm:$0xff]
    %v96 = vld [vmem:[#allocation6 + $0x18] sm:$0xff]
    %v97 = vld [vmem:[#allocation6 + $0x20] sm:$0xff]
    %v98 = vld [vmem:[#allocation6 + $0x28] sm:$0xff]
    %v99 = vld [vmem:[#allocation6 + $0x30] sm:$0xff]
    %v100 = vld [vmem:[#allocation6 + $0x38] sm:$0xff]
    %v101 = vld [vmem:[#allocation6 + $0x40] sm:$0xff]
    %v102 = vld [vmem:[#allocation6 + $0x48] sm:$0xff]
    %v103 = vld [vmem:[#allocation6 + $0x50] sm:$0xff]
    %v104 = vld [vmem:[#allocation6 + $0x58] sm:$0xff]
    %v105 = vld [vmem:[#allocation6 + $0x60] sm:$0xff]
    %v106 = vld [vmem:[#allocation6 + $0x68] sm:$0xff]
    %v107 = vld [vmem:[#allocation6 + $0x70] sm:$0xff]
    %v108 = vld [vmem:[#allocation6 + $0x78] sm:$0xff]
    %v109 = vld [vmem:[#allocation6 + $0x80] sm:$0xff]
    %v110 = vld [vmem:[#allocation6 + $0x88] sm:$0xff]
    %v111 = vld [vmem:[#allocation6 + $0x90] sm:$0xff]
    %v112 = vld [vmem:[#allocation6 + $0x98] sm:$0xff]
    %v113 = vld [vmem:[#allocation6 + $0xa0] sm:$0xff]
    %v114 = vld [vmem:[#allocation6 + $0xa8] sm:$0xff]
    %v115 = vld [vmem:[#allocation6 + $0xb0] sm:$0xff]
    %v116 = vld [vmem:[#allocation6 + $0xb8] sm:$0xff]
    %v117 = vld [vmem:[#allocation6 + $0xc0] sm:$0xff]
    %v118 = vld [vmem:[#allocation6 + $0xc8] sm:$0xff]
    %v119 = vld [vmem:[#allocation6 + $0xd0] sm:$0xff]
    %v120 = vld [vmem:[#allocation6 + $0xd8] sm:$0xff]
    %v121 = vld [vmem:[#allocation6 + $0xe0] sm:$0xff]
    %v122 = vld [vmem:[#allocation6 + $0xe8] sm:$0xff]
    %v123 = vld [vmem:[#allocation6 + $0xf0] sm:$0xff]
    %v124 = vld [vmem:[#allocation6 + $0xf8] sm:$0xff]
    %125 = vmatprep.subr.mxu0 %v94
    %126 = vmatpush1.msra.mxu0 %v93
    %127 = vmatprep.subr.mxu0 %v96
    %128 = vmatpush1.msra.mxu0 %v95
    %129 = vmatprep.subr.mxu0 %v98
    %130 = vmatpush1.msra.mxu0 %v97
    %131 = vmatprep.subr.mxu0 %v100
    %132 = vmatpush1.msra.mxu0 %v99
    %133 = vmatprep.subr.mxu0 %v102
    %134 = vmatpush1.msra.mxu0 %v101
    %135 = vmatprep.subr.mxu0 %v104
    %136 = vmatpush1.msra.mxu0 %v103
    %137 = vmatprep.subr.mxu0 %v106
    %138 = vmatpush1.msra.mxu0 %v105
    %139 = vmatprep.subr.mxu0 %v108
    %140 = vmatpush1.msra.mxu0 %v107
    %141 = vmatprep.subr.mxu0 %v110
    %142 = vmatpush1.msra.mxu0 %v109
    %143 = vmatprep.subr.mxu0 %v112
    %144 = vmatpush1.msra.mxu0 %v111
    %145 = vmatprep.subr.mxu0 %v114
    %146 = vmatpush1.msra.mxu0 %v113
    %147 = vmatprep.subr.mxu0 %v116
    %148 = vmatpush1.msra.mxu0 %v115
    %149 = vmatprep.subr.mxu0 %v118
    %150 = vmatpush1.msra.mxu0 %v117
    %151 = vmatprep.subr.mxu0 %v120
    %152 = vmatpush1.msra.mxu0 %v119
    %153 = vmatprep.subr.mxu0 %v122
    %154 = vmatpush1.msra.mxu0 %v121
    %155 = vmatprep.subr.mxu0 %v124
    %156 = vmatpush1.msra.mxu0 %v123
    %157 = vmatprep.subr.mxu0 0.0
    %158 = vmatpush1.msra.mxu0 0.0
    %159 = vmatprep.subr.mxu0 0.0
    %160 = vmatpush1.msra.mxu0 0.0
    %161 = vmatprep.subr.mxu0 0.0
    %162 = vmatpush1.msra.mxu0 0.0
    %163 = vmatprep.subr.mxu0 0.0
    %164 = vmatpush1.msra.mxu0 0.0
    %165 = vmatprep.subr.mxu0 0.0
    %166 = vmatpush1.msra.mxu0 0.0
    %167 = vmatprep.subr.mxu0 0.0
    %168 = vmatpush1.msra.mxu0 0.0
    %169 = vmatprep.subr.mxu0 0.0
    %170 = vmatpush1.msra.mxu0 0.0
    %171 = vmatprep.subr.mxu0 0.0
    %172 = vmatpush1.msra.mxu0 0.0
    %173 = vmatprep.subr.mxu0 0.0
    %174 = vmatpush1.msra.mxu0 0.0
    %175 = vmatprep.subr.mxu0 0.0
    %176 = vmatpush1.msra.mxu0 0.0
    %177 = vmatprep.subr.mxu0 0.0
    %178 = vmatpush1.msra.mxu0 0.0
    %179 = vmatprep.subr.mxu0 0.0
    %180 = vmatpush1.msra.mxu0 0.0
    %181 = vmatprep.subr.mxu0 0.0
    %182 = vmatpush1.msra.mxu0 0.0
    %183 = vmatprep.subr.mxu0 0.0
    %184 = vmatpush1.msra.mxu0 0.0
    %185 = vmatprep.subr.mxu0 0.0
    %186 = vmatpush1.msra.mxu0 0.0
    %187 = vmatprep.subr.mxu0 0.0
    %188 = vmatpush1.msra.mxu0 0.0
    %189 = vmatprep.mubr.f32.mxu0 0.0
    %190 = vmatmul.mubr.f32.gmra.mrb[0].mxu0 %v92
    %v191 = vpop.f32.mrb[0].mxu0
    %v192 = vadd.f32 0.0, %v191
    %v193 = vpop.f32.mrb[0].mxu0
    %v194 = vadd.f32 0.0, %v193
    %195 = vdwg.mxu0
    %vm196 = vcmp.gt.f32.partialorder %v192, 0.0
    %vm197 = vcmp.gt.f32.partialorder %v194, 0.0
    %v198 = vmul.f32 %v192, 0.01
    %v199 = vmul.f32 %v194, 0.01
    %v200 = vsel %vm196, %v192, %v198
    %v201 = vsel %vm197, %v194, %v199
    %v202 = vld [vmem:[#allocation8] sm:$0xff]
    %v203 = vld [vmem:[#allocation8 + $0x8] sm:$0xff]
    %v204 = vld [vmem:[#allocation8 + $0x10] sm:$0xff]
    %v205 = vld [vmem:[#allocation8 + $0x18] sm:$0xff]
    %v206 = vld [vmem:[#allocation8 + $0x20] sm:$0xff]
    %v207 = vld [vmem:[#allocation8 + $0x28] sm:$0xff]
    %v208 = vld [vmem:[#allocation8 + $0x30] sm:$0xff]
    %v209 = vld [vmem:[#allocation8 + $0x38] sm:$0xff]
    %v210 = vld [vmem:[#allocation8 + $0x40] sm:$0xff]
    %v211 = vld [vmem:[#allocation8 + $0x48] sm:$0xff]
    %v212 = vld [vmem:[#allocation8 + $0x50] sm:$0xff]
    %v213 = vld [vmem:[#allocation8 + $0x58] sm:$0xff]
    %v214 = vld [vmem:[#allocation8 + $0x60] sm:$0xff]
    %v215 = vld [vmem:[#allocation8 + $0x68] sm:$0xff]
    %v216 = vld [vmem:[#allocation8 + $0x70] sm:$0xff]
    %v217 = vld [vmem:[#allocation8 + $0x78] sm:$0xff]
    %v218 = vld [vmem:[#allocation8 + $0x80] sm:$0xff]
    %v219 = vld [vmem:[#allocation8 + $0x88] sm:$0xff]
    %v220 = vld [vmem:[#allocation8 + $0x90] sm:$0xff]
    %v221 = vld [vmem:[#allocation8 + $0x98] sm:$0xff]
    %v222 = vld [vmem:[#allocation8 + $0xa0] sm:$0xff]
    %v223 = vld [vmem:[#allocation8 + $0xa8] sm:$0xff]
    %v224 = vld [vmem:[#allocation8 + $0xb0] sm:$0xff]
    %v225 = vld [vmem:[#allocation8 + $0xb8] sm:$0xff]
    %v226 = vld [vmem:[#allocation8 + $0xc0] sm:$0xff]
    %v227 = vld [vmem:[#allocation8 + $0xc8] sm:$0xff]
    %v228 = vld [vmem:[#allocation8 + $0xd0] sm:$0xff]
    %v229 = vld [vmem:[#allocation8 + $0xd8] sm:$0xff]
    %v230 = vld [vmem:[#allocation8 + $0xe0] sm:$0xff]
    %v231 = vld [vmem:[#allocation8 + $0xe8] sm:$0xff]
    %v232 = vld [vmem:[#allocation8 + $0xf0] sm:$0xff]
    %v233 = vld [vmem:[#allocation8 + $0xf8] sm:$0xff]
    %234 = vmatprep.subr.mxu0 0.0
    %235 = vmatpush1.msra.mxu0 %v202
    %236 = vmatprep.subr.mxu0 0.0
    %237 = vmatpush1.msra.mxu0 %v203
    %238 = vmatprep.subr.mxu0 0.0
    %239 = vmatpush1.msra.mxu0 %v204
    %240 = vmatprep.subr.mxu0 0.0
    %241 = vmatpush1.msra.mxu0 %v205
    %242 = vmatprep.subr.mxu0 0.0
    %243 = vmatpush1.msra.mxu0 %v206
    %244 = vmatprep.subr.mxu0 0.0
    %245 = vmatpush1.msra.mxu0 %v207
    %246 = vmatprep.subr.mxu0 0.0
    %247 = vmatpush1.msra.mxu0 %v208
    %248 = vmatprep.subr.mxu0 0.0
    %249 = vmatpush1.msra.mxu0 %v209
    %250 = vmatprep.subr.mxu0 0.0
    %251 = vmatpush1.msra.mxu0 %v210
    %252 = vmatprep.subr.mxu0 0.0
    %253 = vmatpush1.msra.mxu0 %v211
    %254 = vmatprep.subr.mxu0 0.0
    %255 = vmatpush1.msra.mxu0 %v212
    %256 = vmatprep.subr.mxu0 0.0
    %257 = vmatpush1.msra.mxu0 %v213
    %258 = vmatprep.subr.mxu0 0.0
    %259 = vmatpush1.msra.mxu0 %v214
    %260 = vmatprep.subr.mxu0 0.0
    %261 = vmatpush1.msra.mxu0 %v215
    %262 = vmatprep.subr.mxu0 0.0
    %263 = vmatpush1.msra.mxu0 %v216
    %264 = vmatprep.subr.mxu0 0.0
    %265 = vmatpush1.msra.mxu0 %v217
    %266 = vmatprep.subr.mxu0 0.0
    %267 = vmatpush1.msra.mxu0 %v218
    %268 = vmatprep.subr.mxu0 0.0
    %269 = vmatpush1.msra.mxu0 %v219
    %270 = vmatprep.subr.mxu0 0.0
    %271 = vmatpush1.msra.mxu0 %v220
    %272 = vmatprep.subr.mxu0 0.0
    %273 = vmatpush1.msra.mxu0 %v221
    %274 = vmatprep.subr.mxu0 0.0
    %275 = vmatpush1.msra.mxu0 %v222
    %276 = vmatprep.subr.mxu0 0.0
    %277 = vmatpush1.msra.mxu0 %v223
    %278 = vmatprep.subr.mxu0 0.0
    %279 = vmatpush1.msra.mxu0 %v224
    %280 = vmatprep.subr.mxu0 0.0
    %281 = vmatpush1.msra.mxu0 %v225
    %282 = vmatprep.subr.mxu0 0.0
    %283 = vmatpush1.msra.mxu0 %v226
    %284 = vmatprep.subr.mxu0 0.0
    %285 = vmatpush1.msra.mxu0 %v227
    %286 = vmatprep.subr.mxu0 0.0
    %287 = vmatpush1.msra.mxu0 %v228
    %288 = vmatprep.subr.mxu0 0.0
    %289 = vmatpush1.msra.mxu0 %v229
    %290 = vmatprep.subr.mxu0 0.0
    %291 = vmatpush1.msra.mxu0 %v230
    %292 = vmatprep.subr.mxu0 0.0
    %293 = vmatpush1.msra.mxu0 %v231
    %294 = vmatprep.subr.mxu0 0.0
    %295 = vmatpush1.msra.mxu0 %v232
    %296 = vmatprep.subr.mxu0 0.0
    %297 = vmatpush1.msra.mxu0 %v233
    %298 = vmatprep.mubr.f32.mxu0 %v201
    %299 = vmatmul.mubr.f32.gmra.mrb[0].mxu0 %v200
    %v300 = vpop.f32.mrb[0].mxu0
    %v301 = vadd.f32 0.0, %v300
    %v302 = vpop.f32.mrb[0].mxu0
    %303 = vdwg.mxu0
    %vm304 = vcmp.gt.f32.partialorder %v301, 0.0
    %v305 = vmul.f32 %v301, 0.01
    %v306 = vsel %vm304, %v301, %v305
    %v307 = vld [vmem:[#allocation9] sm:$0xff]
    %v308 = vld [vmem:[#allocation9 + $0x8] sm:$0xff]
    %v309 = vld [vmem:[#allocation9 + $0x10] sm:$0xff]
    %v310 = vld [vmem:[#allocation9 + $0x18] sm:$0xff]
    %v311 = vld [vmem:[#allocation9 + $0x20] sm:$0xff]
    %v312 = vld [vmem:[#allocation9 + $0x28] sm:$0xff]
    %v313 = vld [vmem:[#allocation9 + $0x30] sm:$0xff]
    %v314 = vld [vmem:[#allocation9 + $0x38] sm:$0xff]
    %v315 = vld [vmem:[#allocation9 + $0x40] sm:$0xff]
    %v316 = vld [vmem:[#allocation9 + $0x48] sm:$0xff]
    %v317 = vld [vmem:[#allocation9 + $0x50] sm:$0xff]
    %v318 = vld [vmem:[#allocation9 + $0x58] sm:$0xff]
    %v319 = vld [vmem:[#allocation9 + $0x60] sm:$0xff]
    %v320 = vld [vmem:[#allocation9 + $0x68] sm:$0xff]
    %v321 = vld [vmem:[#allocation9 + $0x70] sm:$0xff]
    %v322 = vld [vmem:[#allocation9 + $0x78] sm:$0xff]
    %v323 = vld [vmem:[#allocation9 + $0x80] sm:$0xff]
    %v324 = vld [vmem:[#allocation9 + $0x88] sm:$0xff]
    %v325 = vld [vmem:[#allocation9 + $0x90] sm:$0xff]
    %v326 = vld [vmem:[#allocation9 + $0x98] sm:$0xff]
    %v327 = vld [vmem:[#allocation9 + $0xa0] sm:$0xff]
    %v328 = vld [vmem:[#allocation9 + $0xa8] sm:$0xff]
    %v329 = vld [vmem:[#allocation9 + $0xb0] sm:$0xff]
    %v330 = vld [vmem:[#allocation9 + $0xb8] sm:$0xff]
    %v331 = vld [vmem:[#allocation9 + $0xc0] sm:$0xff]
    %v332 = vld [vmem:[#allocation9 + $0xc8] sm:$0xff]
    %v333 = vld [vmem:[#allocation9 + $0xd0] sm:$0xff]
    %v334 = vld [vmem:[#allocation9 + $0xd8] sm:$0xff]
    %v335 = vld [vmem:[#allocation9 + $0xe0] sm:$0xff]
    %v336 = vld [vmem:[#allocation9 + $0xe8] sm:$0xff]
    %v337 = vld [vmem:[#allocation9 + $0xf0] sm:$0xff]
    %v338 = vld [vmem:[#allocation9 + $0xf8] sm:$0xff]
    %339 = vmatprep.subr.mxu0 %v308
    %340 = vmatpush1.msra.mxu0 %v307
    %341 = vmatprep.subr.mxu0 %v310
    %342 = vmatpush1.msra.mxu0 %v309
    %343 = vmatprep.subr.mxu0 %v312
    %344 = vmatpush1.msra.mxu0 %v311
    %345 = vmatprep.subr.mxu0 %v314
    %346 = vmatpush1.msra.mxu0 %v313
    %347 = vmatprep.subr.mxu0 %v316
    %348 = vmatpush1.msra.mxu0 %v315
    %349 = vmatprep.subr.mxu0 %v318
    %350 = vmatpush1.msra.mxu0 %v317
    %351 = vmatprep.subr.mxu0 %v320
    %352 = vmatpush1.msra.mxu0 %v319
    %353 = vmatprep.subr.mxu0 %v322
    %354 = vmatpush1.msra.mxu0 %v321
    %355 = vmatprep.subr.mxu0 %v324
    %356 = vmatpush1.msra.mxu0 %v323
    %357 = vmatprep.subr.mxu0 %v326
    %358 = vmatpush1.msra.mxu0 %v325
    %359 = vmatprep.subr.mxu0 %v328
    %360 = vmatpush1.msra.mxu0 %v327
    %361 = vmatprep.subr.mxu0 %v330
    %362 = vmatpush1.msra.mxu0 %v329
    %363 = vmatprep.subr.mxu0 %v332
    %364 = vmatpush1.msra.mxu0 %v331
    %365 = vmatprep.subr.mxu0 %v334
    %366 = vmatpush1.msra.mxu0 %v333
    %367 = vmatprep.subr.mxu0 %v336
    %368 = vmatpush1.msra.mxu0 %v335
    %369 = vmatprep.subr.mxu0 %v338
    %370 = vmatpush1.msra.mxu0 %v337
    %371 = vmatprep.subr.mxu0 0.0
    %372 = vmatpush1.msra.mxu0 0.0
    %373 = vmatprep.subr.mxu0 0.0
    %374 = vmatpush1.msra.mxu0 0.0
    %375 = vmatprep.subr.mxu0 0.0
    %376 = vmatpush1.msra.mxu0 0.0
    %377 = vmatprep.subr.mxu0 0.0
    %378 = vmatpush1.msra.mxu0 0.0
    %379 = vmatprep.subr.mxu0 0.0
    %380 = vmatpush1.msra.mxu0 0.0
    %381 = vmatprep.subr.mxu0 0.0
    %382 = vmatpush1.msra.mxu0 0.0
    %383 = vmatprep.subr.mxu0 0.0
    %384 = vmatpush1.msra.mxu0 0.0
    %385 = vmatprep.subr.mxu0 0.0
    %386 = vmatpush1.msra.mxu0 0.0
    %387 = vmatprep.subr.mxu0 0.0
    %388 = vmatpush1.msra.mxu0 0.0
    %389 = vmatprep.subr.mxu0 0.0
    %390 = vmatpush1.msra.mxu0 0.0
    %391 = vmatprep.subr.mxu0 0.0
    %392 = vmatpush1.msra.mxu0 0.0
    %393 = vmatprep.subr.mxu0 0.0
    %394 = vmatpush1.msra.mxu0 0.0
    %395 = vmatprep.subr.mxu0 0.0
    %396 = vmatpush1.msra.mxu0 0.0
    %397 = vmatprep.subr.mxu0 0.0
    %398 = vmatpush1.msra.mxu0 0.0
    %399 = vmatprep.subr.mxu0 0.0
    %400 = vmatpush1.msra.mxu0 0.0
    %401 = vmatprep.subr.mxu0 0.0
    %402 = vmatpush1.msra.mxu0 0.0
    %403 = vmatprep.mubr.f32.mxu0 0.0
    %404 = vmatmul.mubr.f32.gmra.mrb[0].mxu0 %v306
    %v405 = vpop.f32.mrb[0].mxu0
    %v406 = vadd.f32 0.0, %v405
    %v407 = vpop.f32.mrb[0].mxu0
    %v408 = vadd.f32 0.0, %v407
    %409 = vdwg.mxu0
    %v410 = vld [vmem:[#allocation11] sm:$0xff]
    %v411 = vld [vmem:[#allocation11 + $0x8] sm:$0xff]
    %v412 = vld [vmem:[#allocation11 + $0x10] sm:$0xff]
    %v413 = vld [vmem:[#allocation11 + $0x18] sm:$0xff]
    %v414 = vld [vmem:[#allocation11 + $0x20] sm:$0xff]
    %v415 = vld [vmem:[#allocation11 + $0x28] sm:$0xff]
    %v416 = vld [vmem:[#allocation11 + $0x30] sm:$0xff]
    %v417 = vld [vmem:[#allocation11 + $0x38] sm:$0xff]
    %v418 = vld [vmem:[#allocation11 + $0x40] sm:$0xff]
    %v419 = vld [vmem:[#allocation11 + $0x48] sm:$0xff]
    %v420 = vld [vmem:[#allocation11 + $0x50] sm:$0xff]
    %v421 = vld [vmem:[#allocation11 + $0x58] sm:$0xff]
    %v422 = vld [vmem:[#allocation11 + $0x60] sm:$0xff]
    %v423 = vld [vmem:[#allocation11 + $0x68] sm:$0xff]
    %v424 = vld [vmem:[#allocation11 + $0x70] sm:$0xff]
    %v425 = vld [vmem:[#allocation11 + $0x78] sm:$0xff]
    %v426 = vld [vmem:[#allocation11 + $0x80] sm:$0xff]
    %v427 = vld [vmem:[#allocation11 + $0x88] sm:$0xff]
    %v428 = vld [vmem:[#allocation11 + $0x90] sm:$0xff]
    %v429 = vld [vmem:[#allocation11 + $0x98] sm:$0xff]
    %v430 = vld [vmem:[#allocation11 + $0xa0] sm:$0xff]
    %v431 = vld [vmem:[#allocation11 + $0xa8] sm:$0xff]
    %v432 = vld [vmem:[#allocation11 + $0xb0] sm:$0xff]
    %v433 = vld [vmem:[#allocation11 + $0xb8] sm:$0xff]
    %v434 = vld [vmem:[#allocation11 + $0xc0] sm:$0xff]
    %v435 = vld [vmem:[#allocation11 + $0xc8] sm:$0xff]
    %v436 = vld [vmem:[#allocation11 + $0xd0] sm:$0xff]
    %v437 = vld [vmem:[#allocation11 + $0xd8] sm:$0xff]
    %v438 = vld [vmem:[#allocation11 + $0xe0] sm:$0xff]
    %v439 = vld [vmem:[#allocation11 + $0xe8] sm:$0xff]
    %v440 = vld [vmem:[#allocation11 + $0xf0] sm:$0xff]
    %v441 = vld [vmem:[#allocation11 + $0xf8] sm:$0xff]
    %442 = vmatprep.subr.mxu0 %v411
    %443 = vmatpush1.msra.mxu0 %v410
    %444 = vmatprep.subr.mxu0 %v413
    %445 = vmatpush1.msra.mxu0 %v412
    %446 = vmatprep.subr.mxu0 %v415
    %447 = vmatpush1.msra.mxu0 %v414
    %448 = vmatprep.subr.mxu0 %v417
    %449 = vmatpush1.msra.mxu0 %v416
    %450 = vmatprep.subr.mxu0 %v419
    %451 = vmatpush1.msra.mxu0 %v418
    %452 = vmatprep.subr.mxu0 %v421
    %453 = vmatpush1.msra.mxu0 %v420
    %454 = vmatprep.subr.mxu0 %v423
    %455 = vmatpush1.msra.mxu0 %v422
    %456 = vmatprep.subr.mxu0 %v425
    %457 = vmatpush1.msra.mxu0 %v424
    %458 = vmatprep.subr.mxu0 %v427
    %459 = vmatpush1.msra.mxu0 %v426
    %460 = vmatprep.subr.mxu0 %v429
    %461 = vmatpush1.msra.mxu0 %v428
    %462 = vmatprep.subr.mxu0 %v431
    %463 = vmatpush1.msra.mxu0 %v430
    %464 = vmatprep.subr.mxu0 %v433
    %465 = vmatpush1.msra.mxu0 %v432
    %466 = vmatprep.subr.mxu0 %v435
    %467 = vmatpush1.msra.mxu0 %v434
    %468 = vmatprep.subr.mxu0 %v437
    %469 = vmatpush1.msra.mxu0 %v436
    %470 = vmatprep.subr.mxu0 %v439
    %471 = vmatpush1.msra.mxu0 %v438
    %472 = vmatprep.subr.mxu0 %v441
    %473 = vmatpush1.msra.mxu0 %v440
    %474 = vmatprep.subr.mxu0 0.0
    %475 = vmatpush1.msra.mxu0 0.0
    %476 = vmatprep.subr.mxu0 0.0
    %477 = vmatpush1.msra.mxu0 0.0
    %478 = vmatprep.subr.mxu0 0.0
    %479 = vmatpush1.msra.mxu0 0.0
    %480 = vmatprep.subr.mxu0 0.0
    %481 = vmatpush1.msra.mxu0 0.0
    %482 = vmatprep.subr.mxu0 0.0
    %483 = vmatpush1.msra.mxu0 0.0
    %484 = vmatprep.subr.mxu0 0.0
    %485 = vmatpush1.msra.mxu0 0.0
    %486 = vmatprep.subr.mxu0 0.0
    %487 = vmatpush1.msra.mxu0 0.0
    %488 = vmatprep.subr.mxu0 0.0
    %489 = vmatpush1.msra.mxu0 0.0
    %490 = vmatprep.subr.mxu0 0.0
    %491 = vmatpush1.msra.mxu0 0.0
    %492 = vmatprep.subr.mxu0 0.0
    %493 = vmatpush1.msra.mxu0 0.0
    %494 = vmatprep.subr.mxu0 0.0
    %495 = vmatpush1.msra.mxu0 0.0
    %496 = vmatprep.subr.mxu0 0.0
    %497 = vmatpush1.msra.mxu0 0.0
    %498 = vmatprep.subr.mxu0 0.0
    %499 = vmatpush1.msra.mxu0 0.0
    %500 = vmatprep.subr.mxu0 0.0
    %501 = vmatpush1.msra.mxu0 0.0
    %502 = vmatprep.subr.mxu0 0.0
    %503 = vmatpush1.msra.mxu0 0.0
    %504 = vmatprep.subr.mxu0 0.0
    %505 = vmatpush1.msra.mxu0 0.0
    %506 = vmatprep.mubr.f32.mxu0 0.0
    %507 = vmatmul.mubr.f32.gmra.mrb[0].mxu0 %v306
    %v508 = vpop.f32.mrb[0].mxu0
    %v509 = vadd.f32 0.0, %v508
    %v510 = vpop.f32.mrb[0].mxu0
    %v511 = vadd.f32 0.0, %v510
    %512 = vdwg.mxu0
    %v515 = vcombine.low %v406, %v408
    %v517 = vunpack.c.l.s4 1966171168
    %v518 = vunpack.c.0.s8 %v517
    %v519 = vlaneseq
    %v520 = vshrl.u32 %v519, 7
    %v521 = vsub.s32 %v518, %v520
    %v522 = vrot.slane %v515, %v521
    %v524 = vunpack.c.l.s4 1966171168
    %v525 = vunpack.c.0.s8 %v524
    %v526 = vlaneseq
    %v527 = vshrl.u32 %v526, 7
    %v528 = vsub.s32 %v525, %v527
    %v529 = vrot.slane %v522, %v528
    %v531 = vlaneseq
    %vm532 = vcmp.ge.s32.totalorder %v531, 0
    %vm533 = vcmp.lt.s32.totalorder %v531, 256
    %vm534 = vmand %vm532, %vm533
    %535 = vst.msk [vmem:[#allocation12] sm:$0x3] %vm534, %v529
    %v538 = vcombine.low %v509, %v511
    %v540 = vunpack.c.l.s4 1966171168
    %v541 = vunpack.c.0.s8 %v540
    %v542 = vlaneseq
    %v543 = vshrl.u32 %v542, 7
    %v544 = vsub.s32 %v541, %v543
    %v545 = vrot.slane %v538, %v544
    %v547 = vunpack.c.l.s4 1966171168
    %v548 = vunpack.c.0.s8 %v547
    %v549 = vlaneseq
    %v550 = vshrl.u32 %v549, 7
    %v551 = vsub.s32 %v548, %v550
    %v552 = vrot.slane %v545, %v551
    %554 = vst.msk [vmem:[#allocation13] sm:$0x3] %vm534, %v552
    %v555 = vmul.f32 %v509, 1.442695
    %v556 = vpow.pop %v555
    %v557 = vmul.f32 %v511, 1.442695
    %v558 = vpow.pop %v557
    %v559 = vmul.f32 %v406, %v406
    %v560 = vmul.f32 %v408, %v408
    %v561 = vadd.f32 %v559, %v556
    %v562 = vadd.f32 %v560, %v558
    %v563 = vadd.f32 %v556, 1e-08
    %v564 = vadd.f32 %v558, 1e-08
    %v565 = vlog2.pop %v563
    %v566 = vmul.f32 %v565, 0.6931472
    %v567 = vlog2.pop %v564
    %v568 = vmul.f32 %v567, 0.6931472
    %v569 = vsub.f32 %v561, %v566
    %v570 = vsub.f32 %v562, %v568
    %v571 = vsub.f32 %v569, 1.0
    %v572 = vsub.f32 %v570, 1.0
    %vm573 = vcmask 1040384
    %v574 = vsel %vm573, %v571, 0.0
    %v575 = vsel %vm573, %v572, 0.0
    %v576 = vadd.f32 %v574, %v575
    %577 = vadd.xlane.f32.xlu0 %v576
    %v578 = vpop.xlane.xlu0 %577
    %v579 = vrot.slane %v578, 4
    %v580 = vadd.f32 %v578, %v579
    %v581 = vrot.slane %v580, 2
    %v582 = vadd.f32 %v580, %v581
    %v583 = vrot.slane %v582, 1
    %v584 = vadd.f32 %v582, %v583
    %s585 = vtos %v584
    %s586 = smul.f32 %s585, 0.001953125
    %s587 = scalar_lea.smem [#allocation15], 0
    %588 = sst [smem:[%s587]] %s586
    // Predicated region
    $region42: #{tpu_custom_call.1} parent=1 // pred_check
      _
    $region43: #{tpu_custom_call.1} parent=1 // pred_check_branch
      %590 = sbr.rel (0) target = $region45
    $region44: #{tpu_custom_call.1} parent=1 // pred_region
      %s592 = ssub.s32 32, 32
      %593 = vsyncadd [#allocation4], %s592
      %s595 = sshll.u32 [#allocation12], 4
      %s596 = int_to_ptr.vmem [resolvable:$true] %s595
      %598 = dma.vmem_to_hbm [thread:$0]  %s596, 32, %s5, [#allocation4]
    $region45: #{tpu_custom_call.1} parent=1 // pred_fallthru
      _
    // Predicated region
    $region46: #{tpu_custom_call.1} parent=1 // pred_check
      _
    $region47: #{tpu_custom_call.1} parent=1 // pred_check_branch
      %600 = sbr.rel (0) target = $region49
    $region48: #{tpu_custom_call.1} parent=1 // pred_region
      %s602 = ssub.s32 32, 32
      %603 = vsyncadd [#allocation14], %s602
      %s605 = sshll.u32 [#allocation13], 4
      %s606 = int_to_ptr.vmem [resolvable:$true] %s605
      %608 = dma.vmem_to_hbm [thread:$0]  %s606, 32, %s6, [#allocation14]
    $region49: #{tpu_custom_call.1} parent=1 // pred_fallthru
      _
    // Predicated region
    $region50: #{tpu_custom_call.1} parent=1 // pred_check
      _
    $region51: #{tpu_custom_call.1} parent=1 // pred_check_branch
      %610 = sbr.rel (0) target = $region53
    $region52: #{tpu_custom_call.1} parent=1 // pred_region
      %s612 = ssub.s32 16, 16
      %613 = vsyncadd [#allocation5], %s612
      %616 = dma.smem_to_hbm [#allocation15], 16, %s7, [#allocation5]
    $region53: #{tpu_custom_call.1} parent=1 // pred_fallthru
      _
    // Predicated region
    $region54: #{tpu_custom_call.1} parent=1 // pred_check
      _
    $region55: #{tpu_custom_call.1} parent=1 // pred_check_branch
      %618 = sbr.rel (0) target = $region57
    $region56: #{tpu_custom_call.1} parent=1 // pred_region
      %619 = dma.done [#allocation4], 32
    $region57: #{tpu_custom_call.1} parent=1 // pred_fallthru
      _
    // Predicated region
    $region58: #{tpu_custom_call.1} parent=1 // pred_check
      _
    $region59: #{tpu_custom_call.1} parent=1 // pred_check_branch
      %621 = sbr.rel (0) target = $region61
    $region60: #{tpu_custom_call.1} parent=1 // pred_region
      %622 = dma.done [#allocation14], 32
    $region61: #{tpu_custom_call.1} parent=1 // pred_fallthru
      _
    // Predicated region
    $region62: #{tpu_custom_call.1} parent=1 // pred_check
      _
    $region63: #{tpu_custom_call.1} parent=1 // pred_check_branch
      %624 = sbr.rel (0) target = $region65
    $region64: #{tpu_custom_call.1} parent=1 // pred_region
      %625 = dma.done [#allocation5], 16
    $region65: #{tpu_custom_call.1} parent=1 // pred_fallthru
      _
    %626 = sfence
    %627 = vsyncpa [#allocation3], 1
    %628 = vsyncpa [#allocation7], 1
    %629 = vsyncpa [#allocation10], 1
    %630 = vsyncpa [#allocation4], 1
    %631 = vsyncpa [#allocation14], 1
    %632 = vsyncpa [#allocation5], 1

</llo_original>
